<compile_context>
chip_gen: v7x
topology: tpu7x:2x2x1
jax: 0.10.0
libtpu: 0.0.40
codegen_flags: <defaults>
</compile_context>

<pallas_src>
import functools

import jax
import jax.numpy as jnp
from jax import lax
from jax.experimental import pallas as pl
from jax.experimental.pallas import tpu as pltpu

_NEG_INF = -1e30  # masks padded logit columns out of log-softmax (f32 only!)


def _round_up(n, m):
    return ((n + m - 1) // m) * m


# ----------------------------------------------------------------------------
# Phase B: serial recurrence.  One grid step == TT timesteps of one batch tile.
# Body per step is a single (Bt,Hp)x(Hp,Hp) matmul + add; hidden carried in
# vregs inside the chunk, in VMEM scratch across chunks.
# ----------------------------------------------------------------------------
def _recurrence_kernel(xh_ref, h0_ref, whh_ref, hseq_ref, h_scr, *, tt):
    @pl.when(pl.program_id(1) == 0)            # first time-chunk of this batch tile
    def _():
        h_scr[...] = h0_ref[...].astype(jnp.float32)

    def step(i, h):
        new_h = xh_ref[i] + jnp.dot(h.astype(whh_ref.dtype), whh_ref[...],
                                    preferred_element_type=jnp.float32)
        hseq_ref[i] = new_h.astype(hseq_ref.dtype)
        return new_h

    h_scr[...] = lax.fori_loop(0, tt, step, h_scr[...], unroll=True)


# ----------------------------------------------------------------------------
# Phase C: fully parallel i2o + log-softmax over all timesteps.
#   logits_t = xproj_o_t + h_{t-1} @ Who ; out_t = log_softmax(logits_t)
# ----------------------------------------------------------------------------
def _logits_kernel(xo_ref, hprev_ref, who_ref, out_ref):
    tt, bt, hp = hprev_ref.shape
    op = xo_ref.shape[-1]
    h2 = hprev_ref[...].reshape(tt * bt, hp)           # layout-preserving merge
    logits = (xo_ref[...].reshape(tt * bt, op)
              + jnp.dot(h2.astype(who_ref.dtype), who_ref[...],
                        preferred_element_type=jnp.float32))
    m = jnp.max(logits, axis=-1, keepdims=True)
    z = logits - m
    lse = jnp.log(jnp.sum(jnp.exp(z), axis=-1, keepdims=True))
    out_ref[...] = (z - lse).reshape(tt, bt, op).astype(out_ref.dtype)


# ----------------------------------------------------------------------------
# One-time weight prep: transpose, split the concat, pad to 128 lanes, fold the
# -1e30 pad mask into the f32 bias.  Done once per parameter set.
# ----------------------------------------------------------------------------
def prepare_params(w_i2h, b_i2h, w_i2o, b_i2o, input_size,
                   param_dtype=jnp.float32):
    H, fan_in = w_i2h.shape
    O = w_i2o.shape[0]
    I = input_size
    assert fan_in == I + H

    Hp = _round_up(H, 128)
    Op = _round_up(O, 128)

    w_i2h_t = jnp.transpose(w_i2h)            # (I+H, H)
    w_i2o_t = jnp.transpose(w_i2o)            # (I+H, O)
    wxh, whh = w_i2h_t[:I], w_i2h_t[I:]       # (I, H), (H, H)
    wxo, who = w_i2o_t[:I], w_i2o_t[I:]       # (I, O), (H, O)

    # Fused x -> [hidden | logits] projection (used once, in the parallel pass).
    wx = jnp.zeros((I, Hp + Op), param_dtype)
    wx = wx.at[:, :H].set(wxh.astype(param_dtype))
    wx = wx.at[:, Hp:Hp + O].set(wxo.astype(param_dtype))

    # Bias stays f32 (the -1e30 mask must never be cast to bf16).
    b = jnp.zeros((1, 1, Hp + Op), jnp.float32)
    b = b.at[..., :H].set(b_i2h.astype(jnp.float32))
    b = b.at[..., Hp:].set(_NEG_INF)                      # mask padded logit cols
    b = b.at[..., Hp:Hp + O].set(b_i2o.astype(jnp.float32))

    whh_p = jnp.zeros((Hp, Hp), param_dtype).at[:H, :H].set(whh.astype(param_dtype))
    who_p = jnp.zeros((Hp, Op), param_dtype).at[:H, :O].set(who.astype(param_dtype))

    return {"wx": wx, "b": b, "whh": whh_p, "who": who_p,
            "I": I, "H": H, "O": O, "Hp": Hp, "Op": Op}


def rnn_sequence(xs, h0, params, *, tt=8, batch_block=None):
    """Run the RNN cell over a whole sequence.

    xs: (T, B, I), h0: (B, H)  ->  (log_softmax outputs (T, B, O), hiddens (T, B, H))
    """
    T, B, I = xs.shape
    H, O, Hp, Op = params["H"], params["O"], params["Hp"], params["Op"]
    assert I == params["I"] and h0.shape == (B, H)

    Bp = _round_up(max(B, 8), 8)              # fill the 8-row sublane tile
    Bt = Bp if batch_block is None else batch_block
    assert Bp % Bt == 0
    Tp = _round_up(T, tt)
    NB, NT = Bp // Bt, Tp // tt

    xs_p = jnp.zeros((Tp, Bp, I), jnp.float32).at[:T, :B, :].set(xs.astype(jnp.float32))
    h0_p = jnp.zeros((Bp, Hp), jnp.float32).at[:B, :H].set(h0.astype(jnp.float32))

    # ---- Phase A (parallel, hoisted): one big input-projection matmul --------
    xproj = jnp.einsum("tbi,if->tbf", xs_p, params["wx"],
                       preferred_element_type=jnp.float32) + params["b"]
    xproj_h = xproj[..., :Hp]                 # (Tp, Bp, Hp)
    xproj_o = xproj[..., Hp:]                 # (Tp, Bp, Op), -1e30 on padded cols

    cparams_serial = pltpu.CompilerParams(
        dimension_semantics=("parallel", "arbitrary"),
        vmem_limit_bytes=32 * 1024 * 1024)
    cparams_parallel = pltpu.CompilerParams(
        dimension_semantics=("parallel", "parallel"),
        vmem_limit_bytes=32 * 1024 * 1024)

    # ---- Phase B (serial): hidden recurrence only ----------------------------
    hs_p = pl.pallas_call(
        functools.partial(_recurrence_kernel, tt=tt),
        out_shape=jax.ShapeDtypeStruct((Tp, Bp, Hp), jnp.float32),
        grid=(NB, NT),
        in_specs=[
            pl.BlockSpec((tt, Bt, Hp), lambda b, t: (t, b, 0)),   # xproj_h chunk
            pl.BlockSpec((Bt, Hp), lambda b, t: (b, 0)),          # h0 (per batch tile)
            pl.BlockSpec((Hp, Hp), lambda b, t: (0, 0)),          # Whh (resident)
        ],
        out_specs=pl.BlockSpec((tt, Bt, Hp), lambda b, t: (t, b, 0)),
        scratch_shapes=[pltpu.VMEM((Bt, Hp), jnp.float32)],       # hidden carry
        compiler_params=cparams_serial,
    )(xproj_h, h0_p, params["whh"])

    # Hidden entering each step: [h0, h_0, ..., h_{T-2}]
    hprev = jnp.concatenate([h0_p[None], hs_p[:-1]], axis=0)      # (Tp, Bp, Hp)

    # ---- Phase C (parallel): i2o matmul + log-softmax for all steps ----------
    outs_p = pl.pallas_call(
        _logits_kernel,
        out_shape=jax.ShapeDtypeStruct((Tp, Bp, Op), jnp.float32),
        grid=(NB, NT),
        in_specs=[
            pl.BlockSpec((tt, Bt, Op), lambda b, t: (t, b, 0)),   # xproj_o chunk
            pl.BlockSpec((tt, Bt, Hp), lambda b, t: (t, b, 0)),   # h_{t-1} chunk
            pl.BlockSpec((Hp, Op), lambda b, t: (0, 0)),          # Who (resident)
        ],
        out_specs=pl.BlockSpec((tt, Bt, Op), lambda b, t: (t, b, 0)),
        compiler_params=cparams_parallel,
    )(xproj_o, hprev, params["who"])

    return outs_p[:T, :B, :O], hs_p[:T, :B, :H]


def rnn_cell(x, h, params):
    """Module-style single-step forward: (x (B,I), h (B,H)) -> (output, hidden')."""
    outs, hs = rnn_sequence(x[None], h, params)
    return outs[0], hs[0]


def init_params(key, input_size, hidden_size, output_size):
    """Deterministic init mimicking nn.Linear's uniform(-1/sqrt(fan_in), ...)."""
    k1, k2, k3, k4 = jax.random.split(key, 4)
    fan_in = input_size + hidden_size
    bound = 1.0 / jnp.sqrt(jnp.float32(fan_in))
    w_i2h = jax.random.uniform(k1, (hidden_size, fan_in), jnp.float32, -bound, bound)
    b_i2h = jax.random.uniform(k2, (hidden_size,), jnp.float32, -bound, bound)
    w_i2o = jax.random.uniform(k3, (output_size, fan_in), jnp.float32, -bound, bound)
    b_i2o = jax.random.uniform(k4, (output_size,), jnp.float32, -bound, bound)
    return w_i2h, b_i2h, w_i2o, b_i2o


if __name__ == "__main__":
    input_size, hidden_size, output_size = 16, 32, 10
    batch, seq_len = 2, 8

    key = jax.random.PRNGKey(0)
    kp, kx = jax.random.split(key)
    w_i2h, b_i2h, w_i2o, b_i2o = init_params(kp, input_size, hidden_size, output_size)

    # one-time weight prep (hoisted out of the per-step path)
    # (use param_dtype=jnp.bfloat16 on v6e/v7x for half-size resident weights)
    params = prepare_params(w_i2h, b_i2h, w_i2o, b_i2o, input_size)

    xs = jax.random.normal(kx, (seq_len, batch, input_size), jnp.float32)
    h0 = jnp.zeros((batch, hidden_size), jnp.float32)        # initHidden()

    # full-sequence path (parallel x-proj -> serial recurrence -> parallel softmax)
    outs, hs = rnn_sequence(xs, h0, params)
    jax.block_until_ready((outs, hs))

    # module-style single step still works (T=1, padded to one chunk)
    out1, h1 = rnn_cell(xs[0], h0, params)
    jax.block_until_ready((out1, h1))

    # pure-JAX reference of the same math (scan over PyTorch forward)
    def ref_step(h, x):
        combined = jnp.concatenate([x, h], axis=1)
        new_h = combined @ w_i2h.T + b_i2h
        logits = combined @ w_i2o.T + b_i2o
        out = jax.nn.log_softmax(logits, axis=1)
        return new_h, (out, new_h)

    _, (ref_outs, ref_hs) = lax.scan(ref_step, h0, xs)

    assert jnp.allclose(hs, ref_hs, atol=1e-4, rtol=1e-4), "hidden sequence mismatch"
    assert jnp.allclose(outs, ref_outs, atol=1e-4, rtol=1e-4), "output sequence mismatch"
    assert jnp.allclose(h1, ref_hs[0], atol=1e-4, rtol=1e-4), "single-step hidden mismatch"
    assert jnp.allclose(out1, ref_outs[0], atol=1e-4, rtol=1e-4), "single-step output mismatch"

    print("KERNEL_OK")
</pallas_src>

<mosaic_0001>
module attributes {stable_mosaic.version = 11 : i64} {
  func.func @_recurrence_kernel(%arg0: i32, %arg1: i32, %arg2: memref<8x8x128xf32, #tpu.memory_space<vmem>>, %arg3: memref<8x128xf32, #tpu.memory_space<vmem>>, %arg4: memref<128x128xf32, #tpu.memory_space<vmem>>, %arg5: memref<8x8x128xf32, #tpu.memory_space<vmem>>, %arg6: memref<8x128xf32, #tpu.memory_space<vmem>>) attributes {dimension_semantics = [#tpu.dimension_semantics<parallel>, #tpu.dimension_semantics<arbitrary>], iteration_bounds = array<i64: 1, 1>, scalar_prefetch = 0 : i64, scratch_operands = 1 : i64, tpu.core_type = #tpu.core_type<tc>, window_params = [{transform_indices = @transform_0, window_bounds = array<i64: 8, 8, 128>}, {transform_indices = @transform_1, window_bounds = array<i64: 8, 128>}, {pipeline_mode = #tpu.pipeline_mode<synchronous>, transform_indices = @transform_2, window_bounds = array<i64: 128, 128>}, {transform_indices = @transform_3, window_bounds = array<i64: 8, 8, 128>}]} {
    %c0_i32 = arith.constant 0 : i32
    %0 = arith.cmpi eq, %arg1, %c0_i32 : i32
    %1 = arith.extui %0 : i1 to i32
    %c0_i32_0 = arith.constant 0 : i32
    %2 = arith.cmpi ne, %1, %c0_i32_0 : i32
    scf.if %2 {
      %c0_60 = arith.constant 0 : index
      %c0_61 = arith.constant 0 : index
      %85 = vector.load %arg3[%c0_60, %c0_61] : memref<8x128xf32, #tpu.memory_space<vmem>>, vector<8x128xf32>
      %c0_62 = arith.constant 0 : index
      %c0_63 = arith.constant 0 : index
      %86 = vector.load %arg6[%c0_62, %c0_63] : memref<8x128xf32, #tpu.memory_space<vmem>>, vector<8x128xf32>
      tpu.vector_store %arg6[%c0_62, %c0_63], %85 {strides = array<i32>} : memref<8x128xf32, #tpu.memory_space<vmem>>, vector<8x128xf32>,
    } else {
    }
    %c0 = arith.constant 0 : index
    %c0_1 = arith.constant 0 : index
    %3 = vector.load %arg6[%c0, %c0_1] : memref<8x128xf32, #tpu.memory_space<vmem>>, vector<8x128xf32>
    %c0_i32_2 = arith.constant 0 : i32
    %4 = arith.index_cast %c0_i32_2 : i32 to index
    %c0_3 = arith.constant 0 : index
    %c0_4 = arith.constant 0 : index
    %5 = vector.load %arg2[%4, %c0_3, %c0_4] : memref<8x8x128xf32, #tpu.memory_space<vmem>>, vector<1x8x128xf32>
    %6 = vector.shape_cast %5 : vector<1x8x128xf32> to vector<8x128xf32>
    %c0_5 = arith.constant 0 : index
    %c0_6 = arith.constant 0 : index
    %7 = vector.load %arg4[%c0_5, %c0_6] : memref<128x128xf32, #tpu.memory_space<vmem>>, vector<128x128xf32>
    %cst = arith.constant dense<0.000000e+00> : vector<8x128xf32>
    %8 = tpu.matmul %3, %7, %cst {dimension_numbers = #tpu.dot_dimension_numbers<[1], [0], [0], [1], [0, 0, 1, 1], [], []>} : vector<8x128xf32>, vector<128x128xf32>, vector<8x128xf32> -> vector<8x128xf32>
    %9 = arith.addf %6, %8 : vector<8x128xf32>
    %10 = arith.index_cast %c0_i32_2 : i32 to index
    %c0_7 = arith.constant 0 : index
    %c0_8 = arith.constant 0 : index
    %11 = vector.load %arg5[%10, %c0_7, %c0_8] : memref<8x8x128xf32, #tpu.memory_space<vmem>>, vector<1x8x128xf32>
    %12 = vector.shape_cast %11 : vector<1x8x128xf32> to vector<8x128xf32>
    %13 = vector.shape_cast %9 : vector<8x128xf32> to vector<1x8x128xf32>
    tpu.vector_store %arg5[%10, %c0_7, %c0_8], %13 {strides = array<i32>} : memref<8x8x128xf32, #tpu.memory_space<vmem>>, vector<1x8x128xf32>,
    %c1_i32 = arith.constant 1 : i32
    %14 = arith.index_cast %c1_i32 : i32 to index
    %c0_9 = arith.constant 0 : index
    %c0_10 = arith.constant 0 : index
    %15 = vector.load %arg2[%14, %c0_9, %c0_10] : memref<8x8x128xf32, #tpu.memory_space<vmem>>, vector<1x8x128xf32>
    %16 = vector.shape_cast %15 : vector<1x8x128xf32> to vector<8x128xf32>
    %c0_11 = arith.constant 0 : index
    %c0_12 = arith.constant 0 : index
    %17 = vector.load %arg4[%c0_11, %c0_12] : memref<128x128xf32, #tpu.memory_space<vmem>>, vector<128x128xf32>
    %cst_13 = arith.constant dense<0.000000e+00> : vector<8x128xf32>
    %18 = tpu.matmul %9, %17, %cst_13 {dimension_numbers = #tpu.dot_dimension_numbers<[1], [0], [0], [1], [0, 0, 1, 1], [], []>} : vector<8x128xf32>, vector<128x128xf32>, vector<8x128xf32> -> vector<8x128xf32>
    %19 = arith.addf %16, %18 : vector<8x128xf32>
    %20 = arith.index_cast %c1_i32 : i32 to index
    %c0_14 = arith.constant 0 : index
    %c0_15 = arith.constant 0 : index
    %21 = vector.load %arg5[%20, %c0_14, %c0_15] : memref<8x8x128xf32, #tpu.memory_space<vmem>>, vector<1x8x128xf32>
    %22 = vector.shape_cast %21 : vector<1x8x128xf32> to vector<8x128xf32>
    %23 = vector.shape_cast %19 : vector<8x128xf32> to vector<1x8x128xf32>
    tpu.vector_store %arg5[%20, %c0_14, %c0_15], %23 {strides = array<i32>} : memref<8x8x128xf32, #tpu.memory_space<vmem>>, vector<1x8x128xf32>,
    %c2_i32 = arith.constant 2 : i32
    %24 = arith.index_cast %c2_i32 : i32 to index
    %c0_16 = arith.constant 0 : index
    %c0_17 = arith.constant 0 : index
    %25 = vector.load %arg2[%24, %c0_16, %c0_17] : memref<8x8x128xf32, #tpu.memory_space<vmem>>, vector<1x8x128xf32>
    %26 = vector.shape_cast %25 : vector<1x8x128xf32> to vector<8x128xf32>
    %c0_18 = arith.constant 0 : index
    %c0_19 = arith.constant 0 : index
    %27 = vector.load %arg4[%c0_18, %c0_19] : memref<128x128xf32, #tpu.memory_space<vmem>>, vector<128x128xf32>
    %cst_20 = arith.constant dense<0.000000e+00> : vector<8x128xf32>
    %28 = tpu.matmul %19, %27, %cst_20 {dimension_numbers = #tpu.dot_dimension_numbers<[1], [0], [0], [1], [0, 0, 1, 1], [], []>} : vector<8x128xf32>, vector<128x128xf32>, vector<8x128xf32> -> vector<8x128xf32>
    %29 = arith.addf %26, %28 : vector<8x128xf32>
    %30 = arith.index_cast %c2_i32 : i32 to index
    %c0_21 = arith.constant 0 : index
    %c0_22 = arith.constant 0 : index
    %31 = vector.load %arg5[%30, %c0_21, %c0_22] : memref<8x8x128xf32, #tpu.memory_space<vmem>>, vector<1x8x128xf32>
    %32 = vector.shape_cast %31 : vector<1x8x128xf32> to vector<8x128xf32>
    %33 = vector.shape_cast %29 : vector<8x128xf32> to vector<1x8x128xf32>
    tpu.vector_store %arg5[%30, %c0_21, %c0_22], %33 {strides = array<i32>} : memref<8x8x128xf32, #tpu.memory_space<vmem>>, vector<1x8x128xf32>,
    %c3_i32 = arith.constant 3 : i32
    %34 = arith.index_cast %c3_i32 : i32 to index
    %c0_23 = arith.constant 0 : index
    %c0_24 = arith.constant 0 : index
    %35 = vector.load %arg2[%34, %c0_23, %c0_24] : memref<8x8x128xf32, #tpu.memory_space<vmem>>, vector<1x8x128xf32>
    %36 = vector.shape_cast %35 : vector<1x8x128xf32> to vector<8x128xf32>
    %c0_25 = arith.constant 0 : index
    %c0_26 = arith.constant 0 : index
    %37 = vector.load %arg4[%c0_25, %c0_26] : memref<128x128xf32, #tpu.memory_space<vmem>>, vector<128x128xf32>
    %cst_27 = arith.constant dense<0.000000e+00> : vector<8x128xf32>
    %38 = tpu.matmul %29, %37, %cst_27 {dimension_numbers = #tpu.dot_dimension_numbers<[1], [0], [0], [1], [0, 0, 1, 1], [], []>} : vector<8x128xf32>, vector<128x128xf32>, vector<8x128xf32> -> vector<8x128xf32>
    %39 = arith.addf %36, %38 : vector<8x128xf32>
    %40 = arith.index_cast %c3_i32 : i32 to index
    %c0_28 = arith.constant 0 : index
    %c0_29 = arith.constant 0 : index
    %41 = vector.load %arg5[%40, %c0_28, %c0_29] : memref<8x8x128xf32, #tpu.memory_space<vmem>>, vector<1x8x128xf32>
    %42 = vector.shape_cast %41 : vector<1x8x128xf32> to vector<8x128xf32>
    %43 = vector.shape_cast %39 : vector<8x128xf32> to vector<1x8x128xf32>
    tpu.vector_store %arg5[%40, %c0_28, %c0_29], %43 {strides = array<i32>} : memref<8x8x128xf32, #tpu.memory_space<vmem>>, vector<1x8x128xf32>,
    %c4_i32 = arith.constant 4 : i32
    %44 = arith.index_cast %c4_i32 : i32 to index
    %c0_30 = arith.constant 0 : index
    %c0_31 = arith.constant 0 : index
    %45 = vector.load %arg2[%44, %c0_30, %c0_31] : memref<8x8x128xf32, #tpu.memory_space<vmem>>, vector<1x8x128xf32>
    %46 = vector.shape_cast %45 : vector<1x8x128xf32> to vector<8x128xf32>
    %c0_32 = arith.constant 0 : index
    %c0_33 = arith.constant 0 : index
    %47 = vector.load %arg4[%c0_32, %c0_33] : memref<128x128xf32, #tpu.memory_space<vmem>>, vector<128x128xf32>
    %cst_34 = arith.constant dense<0.000000e+00> : vector<8x128xf32>
    %48 = tpu.matmul %39, %47, %cst_34 {dimension_numbers = #tpu.dot_dimension_numbers<[1], [0], [0], [1], [0, 0, 1, 1], [], []>} : vector<8x128xf32>, vector<128x128xf32>, vector<8x128xf32> -> vector<8x128xf32>
    %49 = arith.addf %46, %48 : vector<8x128xf32>
    %50 = arith.index_cast %c4_i32 : i32 to index
    %c0_35 = arith.constant 0 : index
    %c0_36 = arith.constant 0 : index
    %51 = vector.load %arg5[%50, %c0_35, %c0_36] : memref<8x8x128xf32, #tpu.memory_space<vmem>>, vector<1x8x128xf32>
    %52 = vector.shape_cast %51 : vector<1x8x128xf32> to vector<8x128xf32>
    %53 = vector.shape_cast %49 : vector<8x128xf32> to vector<1x8x128xf32>
    tpu.vector_store %arg5[%50, %c0_35, %c0_36], %53 {strides = array<i32>} : memref<8x8x128xf32, #tpu.memory_space<vmem>>, vector<1x8x128xf32>,
    %c5_i32 = arith.constant 5 : i32
    %54 = arith.index_cast %c5_i32 : i32 to index
    %c0_37 = arith.constant 0 : index
    %c0_38 = arith.constant 0 : index
    %55 = vector.load %arg2[%54, %c0_37, %c0_38] : memref<8x8x128xf32, #tpu.memory_space<vmem>>, vector<1x8x128xf32>
    %56 = vector.shape_cast %55 : vector<1x8x128xf32> to vector<8x128xf32>
    %c0_39 = arith.constant 0 : index
    %c0_40 = arith.constant 0 : index
    %57 = vector.load %arg4[%c0_39, %c0_40] : memref<128x128xf32, #tpu.memory_space<vmem>>, vector<128x128xf32>
    %cst_41 = arith.constant dense<0.000000e+00> : vector<8x128xf32>
    %58 = tpu.matmul %49, %57, %cst_41 {dimension_numbers = #tpu.dot_dimension_numbers<[1], [0], [0], [1], [0, 0, 1, 1], [], []>} : vector<8x128xf32>, vector<128x128xf32>, vector<8x128xf32> -> vector<8x128xf32>
    %59 = arith.addf %56, %58 : vector<8x128xf32>
    %60 = arith.index_cast %c5_i32 : i32 to index
    %c0_42 = arith.constant 0 : index
    %c0_43 = arith.constant 0 : index
    %61 = vector.load %arg5[%60, %c0_42, %c0_43] : memref<8x8x128xf32, #tpu.memory_space<vmem>>, vector<1x8x128xf32>
    %62 = vector.shape_cast %61 : vector<1x8x128xf32> to vector<8x128xf32>
    %63 = vector.shape_cast %59 : vector<8x128xf32> to vector<1x8x128xf32>
    tpu.vector_store %arg5[%60, %c0_42, %c0_43], %63 {strides = array<i32>} : memref<8x8x128xf32, #tpu.memory_space<vmem>>, vector<1x8x128xf32>,
    %c6_i32 = arith.constant 6 : i32
    %64 = arith.index_cast %c6_i32 : i32 to index
    %c0_44 = arith.constant 0 : index
    %c0_45 = arith.constant 0 : index
    %65 = vector.load %arg2[%64, %c0_44, %c0_45] : memref<8x8x128xf32, #tpu.memory_space<vmem>>, vector<1x8x128xf32>
    %66 = vector.shape_cast %65 : vector<1x8x128xf32> to vector<8x128xf32>
    %c0_46 = arith.constant 0 : index
    %c0_47 = arith.constant 0 : index
    %67 = vector.load %arg4[%c0_46, %c0_47] : memref<128x128xf32, #tpu.memory_space<vmem>>, vector<128x128xf32>
    %cst_48 = arith.constant dense<0.000000e+00> : vector<8x128xf32>
    %68 = tpu.matmul %59, %67, %cst_48 {dimension_numbers = #tpu.dot_dimension_numbers<[1], [0], [0], [1], [0, 0, 1, 1], [], []>} : vector<8x128xf32>, vector<128x128xf32>, vector<8x128xf32> -> vector<8x128xf32>
    %69 = arith.addf %66, %68 : vector<8x128xf32>
    %70 = arith.index_cast %c6_i32 : i32 to index
    %c0_49 = arith.constant 0 : index
    %c0_50 = arith.constant 0 : index
    %71 = vector.load %arg5[%70, %c0_49, %c0_50] : memref<8x8x128xf32, #tpu.memory_space<vmem>>, vector<1x8x128xf32>
    %72 = vector.shape_cast %71 : vector<1x8x128xf32> to vector<8x128xf32>
    %73 = vector.shape_cast %69 : vector<8x128xf32> to vector<1x8x128xf32>
    tpu.vector_store %arg5[%70, %c0_49, %c0_50], %73 {strides = array<i32>} : memref<8x8x128xf32, #tpu.memory_space<vmem>>, vector<1x8x128xf32>,
    %c7_i32 = arith.constant 7 : i32
    %74 = arith.index_cast %c7_i32 : i32 to index
    %c0_51 = arith.constant 0 : index
    %c0_52 = arith.constant 0 : index
    %75 = vector.load %arg2[%74, %c0_51, %c0_52] : memref<8x8x128xf32, #tpu.memory_space<vmem>>, vector<1x8x128xf32>
    %76 = vector.shape_cast %75 : vector<1x8x128xf32> to vector<8x128xf32>
    %c0_53 = arith.constant 0 : index
    %c0_54 = arith.constant 0 : index
    %77 = vector.load %arg4[%c0_53, %c0_54] : memref<128x128xf32, #tpu.memory_space<vmem>>, vector<128x128xf32>
    %cst_55 = arith.constant dense<0.000000e+00> : vector<8x128xf32>
    %78 = tpu.matmul %69, %77, %cst_55 {dimension_numbers = #tpu.dot_dimension_numbers<[1], [0], [0], [1], [0, 0, 1, 1], [], []>} : vector<8x128xf32>, vector<128x128xf32>, vector<8x128xf32> -> vector<8x128xf32>
    %79 = arith.addf %76, %78 : vector<8x128xf32>
    %80 = arith.index_cast %c7_i32 : i32 to index
    %c0_56 = arith.constant 0 : index
    %c0_57 = arith.constant 0 : index
    %81 = vector.load %arg5[%80, %c0_56, %c0_57] : memref<8x8x128xf32, #tpu.memory_space<vmem>>, vector<1x8x128xf32>
    %82 = vector.shape_cast %81 : vector<1x8x128xf32> to vector<8x128xf32>
    %83 = vector.shape_cast %79 : vector<8x128xf32> to vector<1x8x128xf32>
    tpu.vector_store %arg5[%80, %c0_56, %c0_57], %83 {strides = array<i32>} : memref<8x8x128xf32, #tpu.memory_space<vmem>>, vector<1x8x128xf32>,
    %c8_i32 = arith.constant 8 : i32
    %c0_58 = arith.constant 0 : index
    %c0_59 = arith.constant 0 : index
    %84 = vector.load %arg6[%c0_58, %c0_59] : memref<8x128xf32, #tpu.memory_space<vmem>>, vector<8x128xf32>
    tpu.vector_store %arg6[%c0_58, %c0_59], %79 {strides = array<i32>} : memref<8x128xf32, #tpu.memory_space<vmem>>, vector<8x128xf32>,
    return
  }
  func.func @transform_0(%arg0: i32, %arg1: i32) -> (i32, i32, i32) {
    %c0_i32 = arith.constant 0 : i32
    %c0_i32_0 = arith.constant 0 : i32
    return %arg1, %arg0, %c0_i32 : i32, i32, i32
  }
  func.func @transform_1(%arg0: i32, %arg1: i32) -> (i32, i32) {
    %c0_i32 = arith.constant 0 : i32
    %c0_i32_0 = arith.constant 0 : i32
    return %arg0, %c0_i32 : i32, i32
  }
  func.func @transform_2(%arg0: i32, %arg1: i32) -> (i32, i32) {
    %c0_i32 = arith.constant 0 : i32
    %c0_i32_0 = arith.constant 0 : i32
    %c0_i32_1 = arith.constant 0 : i32
    return %c0_i32, %c0_i32_0 : i32, i32
  }
  func.func @transform_3(%arg0: i32, %arg1: i32) -> (i32, i32, i32) {
    %c0_i32 = arith.constant 0 : i32
    %c0_i32_0 = arith.constant 0 : i32
    return %arg1, %arg0, %c0_i32 : i32, i32, i32
  }
}

</mosaic_0001>

<llo_original>
// kernel: tpu_custom_call.1
$region0: #{tpu_custom_call.1}
  #allocation0 [shape = 'u32[]', space=smem, size = 0x4, offset = 0x4, fixed_abs, tag = 'smem constant byte address 0x4 - core index']
  #allocation1 [shape = 'u32[144,128]{1,0:T(1,128)}', space=vmem, size = 0x12000, scoped, tag = 'internal scratch']
  #allocation2 [shape = 'f32[8,128]{1,0:T(8,128)}', space=vmem, size = 0x1000, scoped, tag = 'scratch operand']
  %s0 = inlined_call_operand.hbm [shape: f32[8,8,128], index: 0, kind: input, shape index: {}]
  %s1 = inlined_call_operand.hbm [shape: f32[8,128], index: 1, kind: input, shape index: {}]
  %s2 = inlined_call_operand.hbm [shape: f32[128,128], index: 2, kind: input, shape index: {}]
  %s3 = inlined_call_operand.hbm [shape: f32[8,8,128], index: 3, kind: output, shape index: {}]
  %s4 = sld [smem:[#allocation0]]
  $region38: #{tpu_custom_call.1} parent=0
    _
  %s6 = ssub.s32 1, %s4
  %s7 = scalar_select 0, %s6, %s4
  $region1: #{tpu_custom_call.1} parent=0
    #allocation3 [shape = 'u8[32768]{0}', space=vmem, size = 0x8000, scoped, tag = 'input window, operand 0, single buffered']
    #allocation4 [shape = 's32[1]{0}', space=sflag, size = 0x4, scoped, tag = 'scoped memory for tpu_custom_call.1']
    #allocation5 [shape = 's32[1]{0}', space=sflag, size = 0x4, scoped, tag = 'scoped memory for tpu_custom_call.1']
    #allocation6 [shape = 'u8[4096]{0}', space=vmem, size = 0x1000, scoped, tag = 'input window, operand 1, single buffered']
    #allocation7 [shape = 's32[1]{0}', space=sflag, size = 0x4, scoped, tag = 'scoped memory for tpu_custom_call.1']
    #allocation8 [shape = 'u8[65536]{0}', space=vmem, size = 0x10000, scoped, tag = 'input window, operand 2, single buffered']
    #allocation9 [shape = 'u8[32768]{0}', space=vmem, size = 0x8000, scoped, tag = 'output window, operand 0, single buffered']
    %8 = vsyncpa [#allocation4], 0
    %9 = vsyncpa [#allocation7], 0
    %10 = vsyncpa [#allocation5], 0
    // Predicated region
    $region2: #{tpu_custom_call.1} parent=1 // pred_check
      _
    $region3: #{tpu_custom_call.1} parent=1 // pred_check_branch
      %12 = sbr.rel (0) target = $region5
    $region4: #{tpu_custom_call.1} parent=1 // pred_region
      %s14 = ssub.s32 1024, 1024
      %15 = vsyncadd [#allocation4], %s14
      %s16 = sshll.u32 [#allocation3], 4
      %s17 = int_to_ptr.vmem [resolvable:$true] %s16
      %22 = dma.hbm_to_vmem [thread:$0]  %s0, 1024, %s17, [#allocation4], 128, 128, 8
    $region5: #{tpu_custom_call.1} parent=1 // pred_fallthru
      _
    // Predicated region
    $region6: #{tpu_custom_call.1} parent=1 // pred_check
      _
    $region7: #{tpu_custom_call.1} parent=1 // pred_check_branch
      %24 = sbr.rel (0) target = $region9
    $region8: #{tpu_custom_call.1} parent=1 // pred_region
      %s26 = ssub.s32 128, 128
      %27 = vsyncadd [#allocation7], %s26
      %s29 = sshll.u32 [#allocation6], 4
      %s30 = int_to_ptr.vmem [resolvable:$true] %s29
      %32 = dma.hbm_to_vmem [thread:$0]  %s1, 128, %s30, [#allocation7]
    $region9: #{tpu_custom_call.1} parent=1 // pred_fallthru
      _
    // Predicated region
    $region10: #{tpu_custom_call.1} parent=1 // pred_check
      _
    $region11: #{tpu_custom_call.1} parent=1 // pred_check_branch
      %34 = sbr.rel (0) target = $region13
    $region12: #{tpu_custom_call.1} parent=1 // pred_region
      %s36 = ssub.s32 2048, 2048
      %37 = vsyncadd [#allocation7], %s36
      %s38 = sshll.u32 [#allocation8], 4
      %s39 = int_to_ptr.vmem [resolvable:$true] %s38
      %44 = dma.hbm_to_vmem [thread:$0]  %s2, 2048, %s39, [#allocation7], 128, 128, 8
    $region13: #{tpu_custom_call.1} parent=1 // pred_fallthru
      _
    // Predicated region
    $region14: #{tpu_custom_call.1} parent=1 // pred_check
      _
    $region15: #{tpu_custom_call.1} parent=1 // pred_check_branch
      %46 = sbr.rel (0) target = $region17
    $region16: #{tpu_custom_call.1} parent=1 // pred_region
      %47 = dma.done [#allocation4], 1024
    $region17: #{tpu_custom_call.1} parent=1 // pred_fallthru
      _
    // Predicated region
    $region18: #{tpu_custom_call.1} parent=1 // pred_check
      _
    $region19: #{tpu_custom_call.1} parent=1 // pred_check_branch
      %49 = sbr.rel (0) target = $region21
    $region20: #{tpu_custom_call.1} parent=1 // pred_region
      %50 = dma.done [#allocation7], 128
    $region21: #{tpu_custom_call.1} parent=1 // pred_fallthru
      _
    // Predicated region
    $region22: #{tpu_custom_call.1} parent=1 // pred_check
      _
    $region23: #{tpu_custom_call.1} parent=1 // pred_check_branch
      %52 = sbr.rel (0) target = $region25
    $region24: #{tpu_custom_call.1} parent=1 // pred_region
      %53 = dma.done [#allocation7], 2048
    $region25: #{tpu_custom_call.1} parent=1 // pred_fallthru
      _
    %p54 = scmp.eq.s32.totalorder 0, 0
    // Predicated region
    $region26: #{tpu_custom_call.1} parent=1 // pred_check
      %p55 = pneg %p54
    $region27: #{tpu_custom_call.1} parent=1 // pred_check_branch
      %57 = sbr.rel (%p55) target = $region29
    $region28: #{tpu_custom_call.1} parent=1 // pred_region
      %v58 = vld [vmem:[#allocation6] sm:$0xff]
      %59 = vst [vmem:[#allocation2] sm:$0xff] %v58
    $region29: #{tpu_custom_call.1} parent=1 // pred_fallthru
      _
    %v60 = vld [vmem:[#allocation2] sm:$0xff]
    %v61 = vld [vmem:[#allocation3] sm:$0xff]
    %v62 = vld [vmem:[#allocation8] sm:$0xff]
    %v63 = vld [vmem:[#allocation8 + $0x8] sm:$0xff]
    %v64 = vld [vmem:[#allocation8 + $0x10] sm:$0xff]
    %v65 = vld [vmem:[#allocation8 + $0x18] sm:$0xff]
    %v66 = vld [vmem:[#allocation8 + $0x20] sm:$0xff]
    %v67 = vld [vmem:[#allocation8 + $0x28] sm:$0xff]
    %v68 = vld [vmem:[#allocation8 + $0x30] sm:$0xff]
    %v69 = vld [vmem:[#allocation8 + $0x38] sm:$0xff]
    %v70 = vld [vmem:[#allocation8 + $0x40] sm:$0xff]
    %v71 = vld [vmem:[#allocation8 + $0x48] sm:$0xff]
    %v72 = vld [vmem:[#allocation8 + $0x50] sm:$0xff]
    %v73 = vld [vmem:[#allocation8 + $0x58] sm:$0xff]
    %v74 = vld [vmem:[#allocation8 + $0x60] sm:$0xff]
    %v75 = vld [vmem:[#allocation8 + $0x68] sm:$0xff]
    %v76 = vld [vmem:[#allocation8 + $0x70] sm:$0xff]
    %v77 = vld [vmem:[#allocation8 + $0x78] sm:$0xff]
    %78 = vmatprep.subr.mxu0 0.0
    %79 = vmatpush1.msra.mxu0 %v62
    %80 = vmatprep.subr.mxu0 0.0
    %81 = vmatpush1.msra.mxu0 %v63
    %82 = vmatprep.subr.mxu0 0.0
    %83 = vmatpush1.msra.mxu0 %v64
    %84 = vmatprep.subr.mxu0 0.0
    %85 = vmatpush1.msra.mxu0 %v65
    %86 = vmatprep.subr.mxu0 0.0
    %87 = vmatpush1.msra.mxu0 %v66
    %88 = vmatprep.subr.mxu0 0.0
    %89 = vmatpush1.msra.mxu0 %v67
    %90 = vmatprep.subr.mxu0 0.0
    %91 = vmatpush1.msra.mxu0 %v68
    %92 = vmatprep.subr.mxu0 0.0
    %93 = vmatpush1.msra.mxu0 %v69
    %94 = vmatprep.subr.mxu0 0.0
    %95 = vmatpush1.msra.mxu0 %v70
    %96 = vmatprep.subr.mxu0 0.0
    %97 = vmatpush1.msra.mxu0 %v71
    %98 = vmatprep.subr.mxu0 0.0
    %99 = vmatpush1.msra.mxu0 %v72
    %100 = vmatprep.subr.mxu0 0.0
    %101 = vmatpush1.msra.mxu0 %v73
    %102 = vmatprep.subr.mxu0 0.0
    %103 = vmatpush1.msra.mxu0 %v74
    %104 = vmatprep.subr.mxu0 0.0
    %105 = vmatpush1.msra.mxu0 %v75
    %106 = vmatprep.subr.mxu0 0.0
    %107 = vmatpush1.msra.mxu0 %v76
    %108 = vmatprep.subr.mxu0 0.0
    %109 = vmatpush1.msra.mxu0 %v77
    %110 = vmatprep.subr.mxu0 0.0
    %111 = vmatpush1.msra.mxu0 0.0
    %112 = vmatprep.subr.mxu0 0.0
    %113 = vmatpush1.msra.mxu0 0.0
    %114 = vmatprep.subr.mxu0 0.0
    %115 = vmatpush1.msra.mxu0 0.0
    %116 = vmatprep.subr.mxu0 0.0
    %117 = vmatpush1.msra.mxu0 0.0
    %118 = vmatprep.subr.mxu0 0.0
    %119 = vmatpush1.msra.mxu0 0.0
    %120 = vmatprep.subr.mxu0 0.0
    %121 = vmatpush1.msra.mxu0 0.0
    %122 = vmatprep.subr.mxu0 0.0
    %123 = vmatpush1.msra.mxu0 0.0
    %124 = vmatprep.subr.mxu0 0.0
    %125 = vmatpush1.msra.mxu0 0.0
    %126 = vmatprep.subr.mxu0 0.0
    %127 = vmatpush1.msra.mxu0 0.0
    %128 = vmatprep.subr.mxu0 0.0
    %129 = vmatpush1.msra.mxu0 0.0
    %130 = vmatprep.subr.mxu0 0.0
    %131 = vmatpush1.msra.mxu0 0.0
    %132 = vmatprep.subr.mxu0 0.0
    %133 = vmatpush1.msra.mxu0 0.0
    %134 = vmatprep.subr.mxu0 0.0
    %135 = vmatpush1.msra.mxu0 0.0
    %136 = vmatprep.subr.mxu0 0.0
    %137 = vmatpush1.msra.mxu0 0.0
    %138 = vmatprep.subr.mxu0 0.0
    %139 = vmatpush1.msra.mxu0 0.0
    %140 = vmatprep.subr.mxu0 0.0
    %141 = vmatpush1.msra.mxu0 0.0
    %142 = vmatprep.mubr.f32.mxu0 0.0
    %143 = vmatmul.mubr.f32.gmra.mrb[0].mxu0 %v60
    %v144 = vpop.f32.mrb[0].mxu0
    %v145 = vadd.f32 0.0, %v144
    %v146 = vpop.f32.mrb[0].mxu0
    %147 = vdwg.mxu0
    %v148 = vadd.f32 %v61, %v145
    %149 = vst [vmem:[#allocation9] sm:$0xff] %v148
    %s150 = scalar_lea.vmem [#allocation3], 8
    %v151 = vld [vmem:[%s150] sm:$0xff]
    %v152 = vld [vmem:[#allocation8] sm:$0xff]
    %v153 = vld [vmem:[#allocation8 + $0x8] sm:$0xff]
    %v154 = vld [vmem:[#allocation8 + $0x10] sm:$0xff]
    %v155 = vld [vmem:[#allocation8 + $0x18] sm:$0xff]
    %v156 = vld [vmem:[#allocation8 + $0x20] sm:$0xff]
    %v157 = vld [vmem:[#allocation8 + $0x28] sm:$0xff]
    %v158 = vld [vmem:[#allocation8 + $0x30] sm:$0xff]
    %v159 = vld [vmem:[#allocation8 + $0x38] sm:$0xff]
    %v160 = vld [vmem:[#allocation8 + $0x40] sm:$0xff]
    %v161 = vld [vmem:[#allocation8 + $0x48] sm:$0xff]
    %v162 = vld [vmem:[#allocation8 + $0x50] sm:$0xff]
    %v163 = vld [vmem:[#allocation8 + $0x58] sm:$0xff]
    %v164 = vld [vmem:[#allocation8 + $0x60] sm:$0xff]
    %v165 = vld [vmem:[#allocation8 + $0x68] sm:$0xff]
    %v166 = vld [vmem:[#allocation8 + $0x70] sm:$0xff]
    %v167 = vld [vmem:[#allocation8 + $0x78] sm:$0xff]
    %168 = vmatprep.subr.mxu0 0.0
    %169 = vmatpush1.msra.mxu0 %v152
    %170 = vmatprep.subr.mxu0 0.0
    %171 = vmatpush1.msra.mxu0 %v153
    %172 = vmatprep.subr.mxu0 0.0
    %173 = vmatpush1.msra.mxu0 %v154
    %174 = vmatprep.subr.mxu0 0.0
    %175 = vmatpush1.msra.mxu0 %v155
    %176 = vmatprep.subr.mxu0 0.0
    %177 = vmatpush1.msra.mxu0 %v156
    %178 = vmatprep.subr.mxu0 0.0
    %179 = vmatpush1.msra.mxu0 %v157
    %180 = vmatprep.subr.mxu0 0.0
    %181 = vmatpush1.msra.mxu0 %v158
    %182 = vmatprep.subr.mxu0 0.0
    %183 = vmatpush1.msra.mxu0 %v159
    %184 = vmatprep.subr.mxu0 0.0
    %185 = vmatpush1.msra.mxu0 %v160
    %186 = vmatprep.subr.mxu0 0.0
    %187 = vmatpush1.msra.mxu0 %v161
    %188 = vmatprep.subr.mxu0 0.0
    %189 = vmatpush1.msra.mxu0 %v162
    %190 = vmatprep.subr.mxu0 0.0
    %191 = vmatpush1.msra.mxu0 %v163
    %192 = vmatprep.subr.mxu0 0.0
    %193 = vmatpush1.msra.mxu0 %v164
    %194 = vmatprep.subr.mxu0 0.0
    %195 = vmatpush1.msra.mxu0 %v165
    %196 = vmatprep.subr.mxu0 0.0
    %197 = vmatpush1.msra.mxu0 %v166
    %198 = vmatprep.subr.mxu0 0.0
    %199 = vmatpush1.msra.mxu0 %v167
    %200 = vmatprep.subr.mxu0 0.0
    %201 = vmatpush1.msra.mxu0 0.0
    %202 = vmatprep.subr.mxu0 0.0
    %203 = vmatpush1.msra.mxu0 0.0
    %204 = vmatprep.subr.mxu0 0.0
    %205 = vmatpush1.msra.mxu0 0.0
    %206 = vmatprep.subr.mxu0 0.0
    %207 = vmatpush1.msra.mxu0 0.0
    %208 = vmatprep.subr.mxu0 0.0
    %209 = vmatpush1.msra.mxu0 0.0
    %210 = vmatprep.subr.mxu0 0.0
    %211 = vmatpush1.msra.mxu0 0.0
    %212 = vmatprep.subr.mxu0 0.0
    %213 = vmatpush1.msra.mxu0 0.0
    %214 = vmatprep.subr.mxu0 0.0
    %215 = vmatpush1.msra.mxu0 0.0
    %216 = vmatprep.subr.mxu0 0.0
    %217 = vmatpush1.msra.mxu0 0.0
    %218 = vmatprep.subr.mxu0 0.0
    %219 = vmatpush1.msra.mxu0 0.0
    %220 = vmatprep.subr.mxu0 0.0
    %221 = vmatpush1.msra.mxu0 0.0
    %222 = vmatprep.subr.mxu0 0.0
    %223 = vmatpush1.msra.mxu0 0.0
    %224 = vmatprep.subr.mxu0 0.0
    %225 = vmatpush1.msra.mxu0 0.0
    %226 = vmatprep.subr.mxu0 0.0
    %227 = vmatpush1.msra.mxu0 0.0
    %228 = vmatprep.subr.mxu0 0.0
    %229 = vmatpush1.msra.mxu0 0.0
    %230 = vmatprep.subr.mxu0 0.0
    %231 = vmatpush1.msra.mxu0 0.0
    %232 = vmatprep.mubr.f32.mxu0 0.0
    %233 = vmatmul.mubr.f32.gmra.mrb[0].mxu0 %v148
    %v234 = vpop.f32.mrb[0].mxu0
    %v235 = vadd.f32 0.0, %v234
    %v236 = vpop.f32.mrb[0].mxu0
    %237 = vdwg.mxu0
    %v238 = vadd.f32 %v151, %v235
    %s239 = scalar_lea.vmem [#allocation9], 8
    %240 = vst [vmem:[%s239] sm:$0xff] %v238
    %s241 = scalar_lea.vmem [#allocation3], 16
    %v242 = vld [vmem:[%s241] sm:$0xff]
    %v243 = vld [vmem:[#allocation8] sm:$0xff]
    %v244 = vld [vmem:[#allocation8 + $0x8] sm:$0xff]
    %v245 = vld [vmem:[#allocation8 + $0x10] sm:$0xff]
    %v246 = vld [vmem:[#allocation8 + $0x18] sm:$0xff]
    %v247 = vld [vmem:[#allocation8 + $0x20] sm:$0xff]
    %v248 = vld [vmem:[#allocation8 + $0x28] sm:$0xff]
    %v249 = vld [vmem:[#allocation8 + $0x30] sm:$0xff]
    %v250 = vld [vmem:[#allocation8 + $0x38] sm:$0xff]
    %v251 = vld [vmem:[#allocation8 + $0x40] sm:$0xff]
    %v252 = vld [vmem:[#allocation8 + $0x48] sm:$0xff]
    %v253 = vld [vmem:[#allocation8 + $0x50] sm:$0xff]
    %v254 = vld [vmem:[#allocation8 + $0x58] sm:$0xff]
    %v255 = vld [vmem:[#allocation8 + $0x60] sm:$0xff]
    %v256 = vld [vmem:[#allocation8 + $0x68] sm:$0xff]
    %v257 = vld [vmem:[#allocation8 + $0x70] sm:$0xff]
    %v258 = vld [vmem:[#allocation8 + $0x78] sm:$0xff]
    %259 = vmatprep.subr.mxu0 0.0
    %260 = vmatpush1.msra.mxu0 %v243
    %261 = vmatprep.subr.mxu0 0.0
    %262 = vmatpush1.msra.mxu0 %v244
    %263 = vmatprep.subr.mxu0 0.0
    %264 = vmatpush1.msra.mxu0 %v245
    %265 = vmatprep.subr.mxu0 0.0
    %266 = vmatpush1.msra.mxu0 %v246
    %267 = vmatprep.subr.mxu0 0.0
    %268 = vmatpush1.msra.mxu0 %v247
    %269 = vmatprep.subr.mxu0 0.0
    %270 = vmatpush1.msra.mxu0 %v248
    %271 = vmatprep.subr.mxu0 0.0
    %272 = vmatpush1.msra.mxu0 %v249
    %273 = vmatprep.subr.mxu0 0.0
    %274 = vmatpush1.msra.mxu0 %v250
    %275 = vmatprep.subr.mxu0 0.0
    %276 = vmatpush1.msra.mxu0 %v251
    %277 = vmatprep.subr.mxu0 0.0
    %278 = vmatpush1.msra.mxu0 %v252
    %279 = vmatprep.subr.mxu0 0.0
    %280 = vmatpush1.msra.mxu0 %v253
    %281 = vmatprep.subr.mxu0 0.0
    %282 = vmatpush1.msra.mxu0 %v254
    %283 = vmatprep.subr.mxu0 0.0
    %284 = vmatpush1.msra.mxu0 %v255
    %285 = vmatprep.subr.mxu0 0.0
    %286 = vmatpush1.msra.mxu0 %v256
    %287 = vmatprep.subr.mxu0 0.0
    %288 = vmatpush1.msra.mxu0 %v257
    %289 = vmatprep.subr.mxu0 0.0
    %290 = vmatpush1.msra.mxu0 %v258
    %291 = vmatprep.subr.mxu0 0.0
    %292 = vmatpush1.msra.mxu0 0.0
    %293 = vmatprep.subr.mxu0 0.0
    %294 = vmatpush1.msra.mxu0 0.0
    %295 = vmatprep.subr.mxu0 0.0
    %296 = vmatpush1.msra.mxu0 0.0
    %297 = vmatprep.subr.mxu0 0.0
    %298 = vmatpush1.msra.mxu0 0.0
    %299 = vmatprep.subr.mxu0 0.0
    %300 = vmatpush1.msra.mxu0 0.0
    %301 = vmatprep.subr.mxu0 0.0
    %302 = vmatpush1.msra.mxu0 0.0
    %303 = vmatprep.subr.mxu0 0.0
    %304 = vmatpush1.msra.mxu0 0.0
    %305 = vmatprep.subr.mxu0 0.0
    %306 = vmatpush1.msra.mxu0 0.0
    %307 = vmatprep.subr.mxu0 0.0
    %308 = vmatpush1.msra.mxu0 0.0
    %309 = vmatprep.subr.mxu0 0.0
    %310 = vmatpush1.msra.mxu0 0.0
    %311 = vmatprep.subr.mxu0 0.0
    %312 = vmatpush1.msra.mxu0 0.0
    %313 = vmatprep.subr.mxu0 0.0
    %314 = vmatpush1.msra.mxu0 0.0
    %315 = vmatprep.subr.mxu0 0.0
    %316 = vmatpush1.msra.mxu0 0.0
    %317 = vmatprep.subr.mxu0 0.0
    %318 = vmatpush1.msra.mxu0 0.0
    %319 = vmatprep.subr.mxu0 0.0
    %320 = vmatpush1.msra.mxu0 0.0
    %321 = vmatprep.subr.mxu0 0.0
    %322 = vmatpush1.msra.mxu0 0.0
    %323 = vmatprep.mubr.f32.mxu0 0.0
    %324 = vmatmul.mubr.f32.gmra.mrb[0].mxu0 %v238
    %v325 = vpop.f32.mrb[0].mxu0
    %v326 = vadd.f32 0.0, %v325
    %v327 = vpop.f32.mrb[0].mxu0
    %328 = vdwg.mxu0
    %v329 = vadd.f32 %v242, %v326
    %s330 = scalar_lea.vmem [#allocation9], 16
    %331 = vst [vmem:[%s330] sm:$0xff] %v329
    %s332 = scalar_lea.vmem [#allocation3], 24
    %v333 = vld [vmem:[%s332] sm:$0xff]
    %v334 = vld [vmem:[#allocation8] sm:$0xff]
    %v335 = vld [vmem:[#allocation8 + $0x8] sm:$0xff]
    %v336 = vld [vmem:[#allocation8 + $0x10] sm:$0xff]
    %v337 = vld [vmem:[#allocation8 + $0x18] sm:$0xff]
    %v338 = vld [vmem:[#allocation8 + $0x20] sm:$0xff]
    %v339 = vld [vmem:[#allocation8 + $0x28] sm:$0xff]
    %v340 = vld [vmem:[#allocation8 + $0x30] sm:$0xff]
    %v341 = vld [vmem:[#allocation8 + $0x38] sm:$0xff]
    %v342 = vld [vmem:[#allocation8 + $0x40] sm:$0xff]
    %v343 = vld [vmem:[#allocation8 + $0x48] sm:$0xff]
    %v344 = vld [vmem:[#allocation8 + $0x50] sm:$0xff]
    %v345 = vld [vmem:[#allocation8 + $0x58] sm:$0xff]
    %v346 = vld [vmem:[#allocation8 + $0x60] sm:$0xff]
    %v347 = vld [vmem:[#allocation8 + $0x68] sm:$0xff]
    %v348 = vld [vmem:[#allocation8 + $0x70] sm:$0xff]
    %v349 = vld [vmem:[#allocation8 + $0x78] sm:$0xff]
    %350 = vmatprep.subr.mxu0 0.0
    %351 = vmatpush1.msra.mxu0 %v334
    %352 = vmatprep.subr.mxu0 0.0
    %353 = vmatpush1.msra.mxu0 %v335
    %354 = vmatprep.subr.mxu0 0.0
    %355 = vmatpush1.msra.mxu0 %v336
    %356 = vmatprep.subr.mxu0 0.0
    %357 = vmatpush1.msra.mxu0 %v337
    %358 = vmatprep.subr.mxu0 0.0
    %359 = vmatpush1.msra.mxu0 %v338
    %360 = vmatprep.subr.mxu0 0.0
    %361 = vmatpush1.msra.mxu0 %v339
    %362 = vmatprep.subr.mxu0 0.0
    %363 = vmatpush1.msra.mxu0 %v340
    %364 = vmatprep.subr.mxu0 0.0
    %365 = vmatpush1.msra.mxu0 %v341
    %366 = vmatprep.subr.mxu0 0.0
    %367 = vmatpush1.msra.mxu0 %v342
    %368 = vmatprep.subr.mxu0 0.0
    %369 = vmatpush1.msra.mxu0 %v343
    %370 = vmatprep.subr.mxu0 0.0
    %371 = vmatpush1.msra.mxu0 %v344
    %372 = vmatprep.subr.mxu0 0.0
    %373 = vmatpush1.msra.mxu0 %v345
    %374 = vmatprep.subr.mxu0 0.0
    %375 = vmatpush1.msra.mxu0 %v346
    %376 = vmatprep.subr.mxu0 0.0
    %377 = vmatpush1.msra.mxu0 %v347
    %378 = vmatprep.subr.mxu0 0.0
    %379 = vmatpush1.msra.mxu0 %v348
    %380 = vmatprep.subr.mxu0 0.0
    %381 = vmatpush1.msra.mxu0 %v349
    %382 = vmatprep.subr.mxu0 0.0
    %383 = vmatpush1.msra.mxu0 0.0
    %384 = vmatprep.subr.mxu0 0.0
    %385 = vmatpush1.msra.mxu0 0.0
    %386 = vmatprep.subr.mxu0 0.0
    %387 = vmatpush1.msra.mxu0 0.0
    %388 = vmatprep.subr.mxu0 0.0
    %389 = vmatpush1.msra.mxu0 0.0
    %390 = vmatprep.subr.mxu0 0.0
    %391 = vmatpush1.msra.mxu0 0.0
    %392 = vmatprep.subr.mxu0 0.0
    %393 = vmatpush1.msra.mxu0 0.0
    %394 = vmatprep.subr.mxu0 0.0
    %395 = vmatpush1.msra.mxu0 0.0
    %396 = vmatprep.subr.mxu0 0.0
    %397 = vmatpush1.msra.mxu0 0.0
    %398 = vmatprep.subr.mxu0 0.0
    %399 = vmatpush1.msra.mxu0 0.0
    %400 = vmatprep.subr.mxu0 0.0
    %401 = vmatpush1.msra.mxu0 0.0
    %402 = vmatprep.subr.mxu0 0.0
    %403 = vmatpush1.msra.mxu0 0.0
    %404 = vmatprep.subr.mxu0 0.0
    %405 = vmatpush1.msra.mxu0 0.0
    %406 = vmatprep.subr.mxu0 0.0
    %407 = vmatpush1.msra.mxu0 0.0
    %408 = vmatprep.subr.mxu0 0.0
    %409 = vmatpush1.msra.mxu0 0.0
    %410 = vmatprep.subr.mxu0 0.0
    %411 = vmatpush1.msra.mxu0 0.0
    %412 = vmatprep.subr.mxu0 0.0
    %413 = vmatpush1.msra.mxu0 0.0
    %414 = vmatprep.mubr.f32.mxu0 0.0
    %415 = vmatmul.mubr.f32.gmra.mrb[0].mxu0 %v329
    %v416 = vpop.f32.mrb[0].mxu0
    %v417 = vadd.f32 0.0, %v416
    %v418 = vpop.f32.mrb[0].mxu0
    %419 = vdwg.mxu0
    %v420 = vadd.f32 %v333, %v417
    %s421 = scalar_lea.vmem [#allocation9], 24
    %422 = vst [vmem:[%s421] sm:$0xff] %v420
    %s423 = scalar_lea.vmem [#allocation3], 32
    %v424 = vld [vmem:[%s423] sm:$0xff]
    %v425 = vld [vmem:[#allocation8] sm:$0xff]
    %v426 = vld [vmem:[#allocation8 + $0x8] sm:$0xff]
    %v427 = vld [vmem:[#allocation8 + $0x10] sm:$0xff]
    %v428 = vld [vmem:[#allocation8 + $0x18] sm:$0xff]
    %v429 = vld [vmem:[#allocation8 + $0x20] sm:$0xff]
    %v430 = vld [vmem:[#allocation8 + $0x28] sm:$0xff]
    %v431 = vld [vmem:[#allocation8 + $0x30] sm:$0xff]
    %v432 = vld [vmem:[#allocation8 + $0x38] sm:$0xff]
    %v433 = vld [vmem:[#allocation8 + $0x40] sm:$0xff]
    %v434 = vld [vmem:[#allocation8 + $0x48] sm:$0xff]
    %v435 = vld [vmem:[#allocation8 + $0x50] sm:$0xff]
    %v436 = vld [vmem:[#allocation8 + $0x58] sm:$0xff]
    %v437 = vld [vmem:[#allocation8 + $0x60] sm:$0xff]
    %v438 = vld [vmem:[#allocation8 + $0x68] sm:$0xff]
    %v439 = vld [vmem:[#allocation8 + $0x70] sm:$0xff]
    %v440 = vld [vmem:[#allocation8 + $0x78] sm:$0xff]
    %441 = vmatprep.subr.mxu0 0.0
    %442 = vmatpush1.msra.mxu0 %v425
    %443 = vmatprep.subr.mxu0 0.0
    %444 = vmatpush1.msra.mxu0 %v426
    %445 = vmatprep.subr.mxu0 0.0
    %446 = vmatpush1.msra.mxu0 %v427
    %447 = vmatprep.subr.mxu0 0.0
    %448 = vmatpush1.msra.mxu0 %v428
    %449 = vmatprep.subr.mxu0 0.0
    %450 = vmatpush1.msra.mxu0 %v429
    %451 = vmatprep.subr.mxu0 0.0
    %452 = vmatpush1.msra.mxu0 %v430
    %453 = vmatprep.subr.mxu0 0.0
    %454 = vmatpush1.msra.mxu0 %v431
    %455 = vmatprep.subr.mxu0 0.0
    %456 = vmatpush1.msra.mxu0 %v432
    %457 = vmatprep.subr.mxu0 0.0
    %458 = vmatpush1.msra.mxu0 %v433
    %459 = vmatprep.subr.mxu0 0.0
    %460 = vmatpush1.msra.mxu0 %v434
    %461 = vmatprep.subr.mxu0 0.0
    %462 = vmatpush1.msra.mxu0 %v435
    %463 = vmatprep.subr.mxu0 0.0
    %464 = vmatpush1.msra.mxu0 %v436
    %465 = vmatprep.subr.mxu0 0.0
    %466 = vmatpush1.msra.mxu0 %v437
    %467 = vmatprep.subr.mxu0 0.0
    %468 = vmatpush1.msra.mxu0 %v438
    %469 = vmatprep.subr.mxu0 0.0
    %470 = vmatpush1.msra.mxu0 %v439
    %471 = vmatprep.subr.mxu0 0.0
    %472 = vmatpush1.msra.mxu0 %v440
    %473 = vmatprep.subr.mxu0 0.0
    %474 = vmatpush1.msra.mxu0 0.0
    %475 = vmatprep.subr.mxu0 0.0
    %476 = vmatpush1.msra.mxu0 0.0
    %477 = vmatprep.subr.mxu0 0.0
    %478 = vmatpush1.msra.mxu0 0.0
    %479 = vmatprep.subr.mxu0 0.0
    %480 = vmatpush1.msra.mxu0 0.0
    %481 = vmatprep.subr.mxu0 0.0
    %482 = vmatpush1.msra.mxu0 0.0
    %483 = vmatprep.subr.mxu0 0.0
    %484 = vmatpush1.msra.mxu0 0.0
    %485 = vmatprep.subr.mxu0 0.0
    %486 = vmatpush1.msra.mxu0 0.0
    %487 = vmatprep.subr.mxu0 0.0
    %488 = vmatpush1.msra.mxu0 0.0
    %489 = vmatprep.subr.mxu0 0.0
    %490 = vmatpush1.msra.mxu0 0.0
    %491 = vmatprep.subr.mxu0 0.0
    %492 = vmatpush1.msra.mxu0 0.0
    %493 = vmatprep.subr.mxu0 0.0
    %494 = vmatpush1.msra.mxu0 0.0
    %495 = vmatprep.subr.mxu0 0.0
    %496 = vmatpush1.msra.mxu0 0.0
    %497 = vmatprep.subr.mxu0 0.0
    %498 = vmatpush1.msra.mxu0 0.0
    %499 = vmatprep.subr.mxu0 0.0
    %500 = vmatpush1.msra.mxu0 0.0
    %501 = vmatprep.subr.mxu0 0.0
    %502 = vmatpush1.msra.mxu0 0.0
    %503 = vmatprep.subr.mxu0 0.0
    %504 = vmatpush1.msra.mxu0 0.0
    %505 = vmatprep.mubr.f32.mxu0 0.0
    %506 = vmatmul.mubr.f32.gmra.mrb[0].mxu0 %v420
    %v507 = vpop.f32.mrb[0].mxu0
    %v508 = vadd.f32 0.0, %v507
    %v509 = vpop.f32.mrb[0].mxu0
    %510 = vdwg.mxu0
    %v511 = vadd.f32 %v424, %v508
    %s512 = scalar_lea.vmem [#allocation9], 32
    %513 = vst [vmem:[%s512] sm:$0xff] %v511
    %s514 = scalar_lea.vmem [#allocation3], 40
    %v515 = vld [vmem:[%s514] sm:$0xff]
    %v516 = vld [vmem:[#allocation8] sm:$0xff]
    %v517 = vld [vmem:[#allocation8 + $0x8] sm:$0xff]
    %v518 = vld [vmem:[#allocation8 + $0x10] sm:$0xff]
    %v519 = vld [vmem:[#allocation8 + $0x18] sm:$0xff]
    %v520 = vld [vmem:[#allocation8 + $0x20] sm:$0xff]
    %v521 = vld [vmem:[#allocation8 + $0x28] sm:$0xff]
    %v522 = vld [vmem:[#allocation8 + $0x30] sm:$0xff]
    %v523 = vld [vmem:[#allocation8 + $0x38] sm:$0xff]
    %v524 = vld [vmem:[#allocation8 + $0x40] sm:$0xff]
    %v525 = vld [vmem:[#allocation8 + $0x48] sm:$0xff]
    %v526 = vld [vmem:[#allocation8 + $0x50] sm:$0xff]
    %v527 = vld [vmem:[#allocation8 + $0x58] sm:$0xff]
    %v528 = vld [vmem:[#allocation8 + $0x60] sm:$0xff]
    %v529 = vld [vmem:[#allocation8 + $0x68] sm:$0xff]
    %v530 = vld [vmem:[#allocation8 + $0x70] sm:$0xff]
    %v531 = vld [vmem:[#allocation8 + $0x78] sm:$0xff]
    %532 = vmatprep.subr.mxu0 0.0
    %533 = vmatpush1.msra.mxu0 %v516
    %534 = vmatprep.subr.mxu0 0.0
    %535 = vmatpush1.msra.mxu0 %v517
    %536 = vmatprep.subr.mxu0 0.0
    %537 = vmatpush1.msra.mxu0 %v518
    %538 = vmatprep.subr.mxu0 0.0
    %539 = vmatpush1.msra.mxu0 %v519
    %540 = vmatprep.subr.mxu0 0.0
    %541 = vmatpush1.msra.mxu0 %v520
    %542 = vmatprep.subr.mxu0 0.0
    %543 = vmatpush1.msra.mxu0 %v521
    %544 = vmatprep.subr.mxu0 0.0
    %545 = vmatpush1.msra.mxu0 %v522
    %546 = vmatprep.subr.mxu0 0.0
    %547 = vmatpush1.msra.mxu0 %v523
    %548 = vmatprep.subr.mxu0 0.0
    %549 = vmatpush1.msra.mxu0 %v524
    %550 = vmatprep.subr.mxu0 0.0
    %551 = vmatpush1.msra.mxu0 %v525
    %552 = vmatprep.subr.mxu0 0.0
    %553 = vmatpush1.msra.mxu0 %v526
    %554 = vmatprep.subr.mxu0 0.0
    %555 = vmatpush1.msra.mxu0 %v527
    %556 = vmatprep.subr.mxu0 0.0
    %557 = vmatpush1.msra.mxu0 %v528
    %558 = vmatprep.subr.mxu0 0.0
    %559 = vmatpush1.msra.mxu0 %v529
    %560 = vmatprep.subr.mxu0 0.0
    %561 = vmatpush1.msra.mxu0 %v530
    %562 = vmatprep.subr.mxu0 0.0
    %563 = vmatpush1.msra.mxu0 %v531
    %564 = vmatprep.subr.mxu0 0.0
    %565 = vmatpush1.msra.mxu0 0.0
    %566 = vmatprep.subr.mxu0 0.0
    %567 = vmatpush1.msra.mxu0 0.0
    %568 = vmatprep.subr.mxu0 0.0
    %569 = vmatpush1.msra.mxu0 0.0
    %570 = vmatprep.subr.mxu0 0.0
    %571 = vmatpush1.msra.mxu0 0.0
    %572 = vmatprep.subr.mxu0 0.0
    %573 = vmatpush1.msra.mxu0 0.0
    %574 = vmatprep.subr.mxu0 0.0
    %575 = vmatpush1.msra.mxu0 0.0
    %576 = vmatprep.subr.mxu0 0.0
    %577 = vmatpush1.msra.mxu0 0.0
    %578 = vmatprep.subr.mxu0 0.0
    %579 = vmatpush1.msra.mxu0 0.0
    %580 = vmatprep.subr.mxu0 0.0
    %581 = vmatpush1.msra.mxu0 0.0
    %582 = vmatprep.subr.mxu0 0.0
    %583 = vmatpush1.msra.mxu0 0.0
    %584 = vmatprep.subr.mxu0 0.0
    %585 = vmatpush1.msra.mxu0 0.0
    %586 = vmatprep.subr.mxu0 0.0
    %587 = vmatpush1.msra.mxu0 0.0
    %588 = vmatprep.subr.mxu0 0.0
    %589 = vmatpush1.msra.mxu0 0.0
    %590 = vmatprep.subr.mxu0 0.0
    %591 = vmatpush1.msra.mxu0 0.0
    %592 = vmatprep.subr.mxu0 0.0
    %593 = vmatpush1.msra.mxu0 0.0
    %594 = vmatprep.subr.mxu0 0.0
    %595 = vmatpush1.msra.mxu0 0.0
    %596 = vmatprep.mubr.f32.mxu0 0.0
    %597 = vmatmul.mubr.f32.gmra.mrb[0].mxu0 %v511
    %v598 = vpop.f32.mrb[0].mxu0
    %v599 = vadd.f32 0.0, %v598
    %v600 = vpop.f32.mrb[0].mxu0
    %601 = vdwg.mxu0
    %v602 = vadd.f32 %v515, %v599
    %s603 = scalar_lea.vmem [#allocation9], 40
    %604 = vst [vmem:[%s603] sm:$0xff] %v602
    %s605 = scalar_lea.vmem [#allocation3], 48
    %v606 = vld [vmem:[%s605] sm:$0xff]
    %v607 = vld [vmem:[#allocation8] sm:$0xff]
    %v608 = vld [vmem:[#allocation8 + $0x8] sm:$0xff]
    %v609 = vld [vmem:[#allocation8 + $0x10] sm:$0xff]
    %v610 = vld [vmem:[#allocation8 + $0x18] sm:$0xff]
    %v611 = vld [vmem:[#allocation8 + $0x20] sm:$0xff]
    %v612 = vld [vmem:[#allocation8 + $0x28] sm:$0xff]
    %v613 = vld [vmem:[#allocation8 + $0x30] sm:$0xff]
    %v614 = vld [vmem:[#allocation8 + $0x38] sm:$0xff]
    %v615 = vld [vmem:[#allocation8 + $0x40] sm:$0xff]
    %v616 = vld [vmem:[#allocation8 + $0x48] sm:$0xff]
    %v617 = vld [vmem:[#allocation8 + $0x50] sm:$0xff]
    %v618 = vld [vmem:[#allocation8 + $0x58] sm:$0xff]
    %v619 = vld [vmem:[#allocation8 + $0x60] sm:$0xff]
    %v620 = vld [vmem:[#allocation8 + $0x68] sm:$0xff]
    %v621 = vld [vmem:[#allocation8 + $0x70] sm:$0xff]
    %v622 = vld [vmem:[#allocation8 + $0x78] sm:$0xff]
    %623 = vmatprep.subr.mxu0 0.0
    %624 = vmatpush1.msra.mxu0 %v607
    %625 = vmatprep.subr.mxu0 0.0
    %626 = vmatpush1.msra.mxu0 %v608
    %627 = vmatprep.subr.mxu0 0.0
    %628 = vmatpush1.msra.mxu0 %v609
    %629 = vmatprep.subr.mxu0 0.0
    %630 = vmatpush1.msra.mxu0 %v610
    %631 = vmatprep.subr.mxu0 0.0
    %632 = vmatpush1.msra.mxu0 %v611
    %633 = vmatprep.subr.mxu0 0.0
    %634 = vmatpush1.msra.mxu0 %v612
    %635 = vmatprep.subr.mxu0 0.0
    %636 = vmatpush1.msra.mxu0 %v613
    %637 = vmatprep.subr.mxu0 0.0
    %638 = vmatpush1.msra.mxu0 %v614
    %639 = vmatprep.subr.mxu0 0.0
    %640 = vmatpush1.msra.mxu0 %v615
    %641 = vmatprep.subr.mxu0 0.0
    %642 = vmatpush1.msra.mxu0 %v616
    %643 = vmatprep.subr.mxu0 0.0
    %644 = vmatpush1.msra.mxu0 %v617
    %645 = vmatprep.subr.mxu0 0.0
    %646 = vmatpush1.msra.mxu0 %v618
    %647 = vmatprep.subr.mxu0 0.0
    %648 = vmatpush1.msra.mxu0 %v619
    %649 = vmatprep.subr.mxu0 0.0
    %650 = vmatpush1.msra.mxu0 %v620
    %651 = vmatprep.subr.mxu0 0.0
    %652 = vmatpush1.msra.mxu0 %v621
    %653 = vmatprep.subr.mxu0 0.0
    %654 = vmatpush1.msra.mxu0 %v622
    %655 = vmatprep.subr.mxu0 0.0
    %656 = vmatpush1.msra.mxu0 0.0
    %657 = vmatprep.subr.mxu0 0.0
    %658 = vmatpush1.msra.mxu0 0.0
    %659 = vmatprep.subr.mxu0 0.0
    %660 = vmatpush1.msra.mxu0 0.0
    %661 = vmatprep.subr.mxu0 0.0
    %662 = vmatpush1.msra.mxu0 0.0
    %663 = vmatprep.subr.mxu0 0.0
    %664 = vmatpush1.msra.mxu0 0.0
    %665 = vmatprep.subr.mxu0 0.0
    %666 = vmatpush1.msra.mxu0 0.0
    %667 = vmatprep.subr.mxu0 0.0
    %668 = vmatpush1.msra.mxu0 0.0
    %669 = vmatprep.subr.mxu0 0.0
    %670 = vmatpush1.msra.mxu0 0.0
    %671 = vmatprep.subr.mxu0 0.0
    %672 = vmatpush1.msra.mxu0 0.0
    %673 = vmatprep.subr.mxu0 0.0
    %674 = vmatpush1.msra.mxu0 0.0
    %675 = vmatprep.subr.mxu0 0.0
    %676 = vmatpush1.msra.mxu0 0.0
    %677 = vmatprep.subr.mxu0 0.0
    %678 = vmatpush1.msra.mxu0 0.0
    %679 = vmatprep.subr.mxu0 0.0
    %680 = vmatpush1.msra.mxu0 0.0
    %681 = vmatprep.subr.mxu0 0.0
    %682 = vmatpush1.msra.mxu0 0.0
    %683 = vmatprep.subr.mxu0 0.0
    %684 = vmatpush1.msra.mxu0 0.0
    %685 = vmatprep.subr.mxu0 0.0
    %686 = vmatpush1.msra.mxu0 0.0
    %687 = vmatprep.mubr.f32.mxu0 0.0
    %688 = vmatmul.mubr.f32.gmra.mrb[0].mxu0 %v602
    %v689 = vpop.f32.mrb[0].mxu0
    %v690 = vadd.f32 0.0, %v689
    %v691 = vpop.f32.mrb[0].mxu0
    %692 = vdwg.mxu0
    %v693 = vadd.f32 %v606, %v690
    %s694 = scalar_lea.vmem [#allocation9], 48
    %695 = vst [vmem:[%s694] sm:$0xff] %v693
    %s696 = scalar_lea.vmem [#allocation3], 56
    %v697 = vld [vmem:[%s696] sm:$0xff]
    %v698 = vld [vmem:[#allocation8] sm:$0xff]
    %v699 = vld [vmem:[#allocation8 + $0x8] sm:$0xff]
    %v700 = vld [vmem:[#allocation8 + $0x10] sm:$0xff]
    %v701 = vld [vmem:[#allocation8 + $0x18] sm:$0xff]
    %v702 = vld [vmem:[#allocation8 + $0x20] sm:$0xff]
    %v703 = vld [vmem:[#allocation8 + $0x28] sm:$0xff]
    %v704 = vld [vmem:[#allocation8 + $0x30] sm:$0xff]
    %v705 = vld [vmem:[#allocation8 + $0x38] sm:$0xff]
    %v706 = vld [vmem:[#allocation8 + $0x40] sm:$0xff]
    %v707 = vld [vmem:[#allocation8 + $0x48] sm:$0xff]
    %v708 = vld [vmem:[#allocation8 + $0x50] sm:$0xff]
    %v709 = vld [vmem:[#allocation8 + $0x58] sm:$0xff]
    %v710 = vld [vmem:[#allocation8 + $0x60] sm:$0xff]
    %v711 = vld [vmem:[#allocation8 + $0x68] sm:$0xff]
    %v712 = vld [vmem:[#allocation8 + $0x70] sm:$0xff]
    %v713 = vld [vmem:[#allocation8 + $0x78] sm:$0xff]
    %714 = vmatprep.subr.mxu0 0.0
    %715 = vmatpush1.msra.mxu0 %v698
    %716 = vmatprep.subr.mxu0 0.0
    %717 = vmatpush1.msra.mxu0 %v699
    %718 = vmatprep.subr.mxu0 0.0
    %719 = vmatpush1.msra.mxu0 %v700
    %720 = vmatprep.subr.mxu0 0.0
    %721 = vmatpush1.msra.mxu0 %v701
    %722 = vmatprep.subr.mxu0 0.0
    %723 = vmatpush1.msra.mxu0 %v702
    %724 = vmatprep.subr.mxu0 0.0
    %725 = vmatpush1.msra.mxu0 %v703
    %726 = vmatprep.subr.mxu0 0.0
    %727 = vmatpush1.msra.mxu0 %v704
    %728 = vmatprep.subr.mxu0 0.0
    %729 = vmatpush1.msra.mxu0 %v705
    %730 = vmatprep.subr.mxu0 0.0
    %731 = vmatpush1.msra.mxu0 %v706
    %732 = vmatprep.subr.mxu0 0.0
    %733 = vmatpush1.msra.mxu0 %v707
    %734 = vmatprep.subr.mxu0 0.0
    %735 = vmatpush1.msra.mxu0 %v708
    %736 = vmatprep.subr.mxu0 0.0
    %737 = vmatpush1.msra.mxu0 %v709
    %738 = vmatprep.subr.mxu0 0.0
    %739 = vmatpush1.msra.mxu0 %v710
    %740 = vmatprep.subr.mxu0 0.0
    %741 = vmatpush1.msra.mxu0 %v711
    %742 = vmatprep.subr.mxu0 0.0
    %743 = vmatpush1.msra.mxu0 %v712
    %744 = vmatprep.subr.mxu0 0.0
    %745 = vmatpush1.msra.mxu0 %v713
    %746 = vmatprep.subr.mxu0 0.0
    %747 = vmatpush1.msra.mxu0 0.0
    %748 = vmatprep.subr.mxu0 0.0
    %749 = vmatpush1.msra.mxu0 0.0
    %750 = vmatprep.subr.mxu0 0.0
    %751 = vmatpush1.msra.mxu0 0.0
    %752 = vmatprep.subr.mxu0 0.0
    %753 = vmatpush1.msra.mxu0 0.0
    %754 = vmatprep.subr.mxu0 0.0
    %755 = vmatpush1.msra.mxu0 0.0
    %756 = vmatprep.subr.mxu0 0.0
    %757 = vmatpush1.msra.mxu0 0.0
    %758 = vmatprep.subr.mxu0 0.0
    %759 = vmatpush1.msra.mxu0 0.0
    %760 = vmatprep.subr.mxu0 0.0
    %761 = vmatpush1.msra.mxu0 0.0
    %762 = vmatprep.subr.mxu0 0.0
    %763 = vmatpush1.msra.mxu0 0.0
    %764 = vmatprep.subr.mxu0 0.0
    %765 = vmatpush1.msra.mxu0 0.0
    %766 = vmatprep.subr.mxu0 0.0
    %767 = vmatpush1.msra.mxu0 0.0
    %768 = vmatprep.subr.mxu0 0.0
    %769 = vmatpush1.msra.mxu0 0.0
    %770 = vmatprep.subr.mxu0 0.0
    %771 = vmatpush1.msra.mxu0 0.0
    %772 = vmatprep.subr.mxu0 0.0
    %773 = vmatpush1.msra.mxu0 0.0
    %774 = vmatprep.subr.mxu0 0.0
    %775 = vmatpush1.msra.mxu0 0.0
    %776 = vmatprep.subr.mxu0 0.0
    %777 = vmatpush1.msra.mxu0 0.0
    %778 = vmatprep.mubr.f32.mxu0 0.0
    %779 = vmatmul.mubr.f32.gmra.mrb[0].mxu0 %v693
    %v780 = vpop.f32.mrb[0].mxu0
    %v781 = vadd.f32 0.0, %v780
    %v782 = vpop.f32.mrb[0].mxu0
    %783 = vdwg.mxu0
    %v784 = vadd.f32 %v697, %v781
    %s785 = scalar_lea.vmem [#allocation9], 56
    %786 = vst [vmem:[%s785] sm:$0xff] %v784
    %787 = vst [vmem:[#allocation2] sm:$0xff] %v784
    // Predicated region
    $region30: #{tpu_custom_call.1} parent=1 // pred_check
      _
    $region31: #{tpu_custom_call.1} parent=1 // pred_check_branch
      %789 = sbr.rel (0) target = $region33
    $region32: #{tpu_custom_call.1} parent=1 // pred_region
      %s791 = ssub.s32 1024, 1024
      %792 = vsyncadd [#allocation5], %s791
      %s793 = sshll.u32 [#allocation9], 4
      %s794 = int_to_ptr.vmem [resolvable:$true] %s793
      %799 = dma.vmem_to_hbm [thread:$0]  %s794, 1024, %s3, [#allocation5], 128, 128, 8
    $region33: #{tpu_custom_call.1} parent=1 // pred_fallthru
      _
    // Predicated region
    $region34: #{tpu_custom_call.1} parent=1 // pred_check
      _
    $region35: #{tpu_custom_call.1} parent=1 // pred_check_branch
      %801 = sbr.rel (0) target = $region37
    $region36: #{tpu_custom_call.1} parent=1 // pred_region
      %802 = dma.done [#allocation5], 1024
    $region37: #{tpu_custom_call.1} parent=1 // pred_fallthru
      _
    %803 = vsyncpa [#allocation4], 1
    %804 = vsyncpa [#allocation7], 1
    %805 = vsyncpa [#allocation5], 1

</llo_original>
